<compile_context>
chip_gen: v7x
topology: tpu7x:2x2x1
jax: 0.10.0
libtpu: 0.0.40
codegen_flags: <defaults>
</compile_context>

<pallas_src>
import functools

import jax
import jax.numpy as jnp
import numpy as np
from jax.experimental import pallas as pl
from jax.experimental.pallas import tpu as pltpu


def _make_lstm_head_kernel(T, B, H, F_aug):
    """Kernel over one batch tile of B sequences (B a multiple of 8)."""
    G = 4 * H

    def kernel(x_ref, p_ref, out_ref):
        # x_ref  : (T*B, F_aug)  time-major inside the tile: row = t*B + b
        #          feature block = [x | 1.0 (bias column) | 0-pad]
        # p_ref  : (F_aug + 2H + 8, 4H) packed params:
        #          rows [0:F_aug)          = [W_ih^T ; b_ih+b_hh (1 row) ; 0-pad]
        #          rows [F_aug:F_aug+H)    = W_hh^T
        #          rows [F_aug+H:F_aug+2H) = W_lin^T padded to 4H cols
        #          row  [F_aug+2H]         = b_lin padded to 4H cols (rest 0-pad)
        # out_ref: (B, 4H) lane-dense; only the first n_out cols are meaningful.
        w_in = p_ref[0:F_aug, :]                            # (F_aug, 4H)
        w_hh = p_ref[F_aug:F_aug + H, :]                    # (H, 4H)
        w_lin = p_ref[F_aug + H:F_aug + 2 * H, :]           # (H, 4H)
        b_lin = p_ref[F_aug + 2 * H:F_aug + 2 * H + 1, :]   # (1, 4H)

        # One batched projection of the whole sequence.  The fused LSTM bias rides
        # along via the 1.0 feature column, so no bias add appears in the loop.
        gx = jnp.dot(x_ref[...], w_in,
                     preferred_element_type=jnp.float32)    # (T*B, 4H)

        # Gate-selector lane mask (hoisted out of the recurrence): tanh for the
        # g block [2H,3H), sigmoid for i/f/o.
        lane = jax.lax.broadcasted_iota(jnp.int32, (B, G), 1)
        is_g = (lane >= 2 * H) & (lane < 3 * H)

        h = jnp.zeros((B, H), jnp.float32)
        c = jnp.zeros((B, H), jnp.float32)

        # Short fixed-length recurrence -> static unroll (T is small here).
        # TODO(synk): for long sequences switch to lax.fori_loop(..., unroll=k)
        # with pl.ds-indexed gx rows to keep code size / vreg pressure flat.
        for t in range(T):
            # Static slice at a multiple of B (>=8) sublanes: aligned, cheap.
            gates = gx[t * B:(t + 1) * B, :] + jnp.dot(
                h, w_hh, preferred_element_type=jnp.float32)          # (B, 4H)
            act = jnp.where(is_g, jnp.tanh(gates), jax.nn.sigmoid(gates))
            # PyTorch gate order [i | f | g | o]; H-lane slices map to XLU rotates.
            i = act[:, 0 * H:1 * H]
            f = act[:, 1 * H:2 * H]
            g = act[:, 2 * H:3 * H]
            o = act[:, 3 * H:4 * H]
            c = f * c + i * g
            h = o * jnp.tanh(c)

        # Linear head on hn[0] (layer-0 final hidden), written lane-dense.
        out_ref[...] = (jnp.dot(h, w_lin, preferred_element_type=jnp.float32)
                        + b_lin).astype(out_ref.dtype)

    return kernel


def shallow_regression_lstm_forward(x, params, *, b_tile=8):
    """x: (B, T, F) float32.  params: dict of PyTorch-shaped LSTM/Linear weights."""
    B, T, F = x.shape
    H = params["w_hh_l0"].shape[1]
    n_out = params["w_lin"].shape[0]
    G = 4 * H
    assert n_out <= G
    F_aug = ((F + 1 + 7) // 8) * 8          # features + bias column, sublane aligned

    # Pad batch to a multiple of b_tile (>= 8 -> full f32 sublane tile).
    B_pad = ((B + b_tile - 1) // b_tile) * b_tile
    n_tiles = B_pad // b_tile

    # ---- glue: transpose to (in, out), fuse biases, pack into one VMEM slab ----
    wih0 = params["w_ih_l0"].T                                   # (F, 4H)
    whh0 = params["w_hh_l0"].T                                   # (H, 4H)
    b0 = params["b_ih_l0"] + params["b_hh_l0"]                   # (4H,)
    wlin = params["w_lin"].T                                     # (H, n_out)
    blin = params["b_lin"]                                       # (n_out,)

    in_block = jnp.zeros((F_aug, G), jnp.float32)
    in_block = in_block.at[:F, :].set(wih0).at[F, :].set(b0)     # weights + fused bias
    wlin_pad = jnp.zeros((H, G), jnp.float32).at[:, :n_out].set(wlin)
    blin_pad = jnp.zeros((8, G), jnp.float32).at[0, :n_out].set(blin)
    packed = jnp.concatenate([in_block, whh0, wlin_pad, blin_pad], axis=0)
    # packed: (F_aug + 2H + 8, 4H) -- lane-dense, sublane-aligned sections.

    # ---- layout plumbing (host-side, so no in-kernel relayouts): ----
    # (B, T, F) -> zero-pad batch & features, append 1.0 bias column,
    # -> (n_tiles, T*b_tile, F_aug) with row index t*b_tile + b inside each tile.
    x_p = jnp.zeros((B_pad, T, F_aug), jnp.float32)
    x_p = x_p.at[:B, :, :F].set(x.astype(jnp.float32))
    x_p = x_p.at[:, :, F].set(1.0)
    x_p = x_p.reshape(n_tiles, b_tile, T, F_aug).transpose(0, 2, 1, 3)
    x2d = x_p.reshape(n_tiles, T * b_tile, F_aug)

    kernel = _make_lstm_head_kernel(T, b_tile, H, F_aug)

    # Layer-1 LSTM weights are intentionally not passed: the module output
    # (Linear(hn[0])) does not depend on them.
    out_pad = pl.pallas_call(
        kernel,
        out_shape=jax.ShapeDtypeStruct((B_pad, G), jnp.float32),   # lane-dense out
        grid=(n_tiles,),
        in_specs=[
            pl.BlockSpec((None, T * b_tile, F_aug), lambda i: (i, 0, 0)),
            pl.BlockSpec(packed.shape, lambda i: (0, 0)),
        ],
        out_specs=pl.BlockSpec((b_tile, G), lambda i: (i, 0)),
        compiler_params=pltpu.CompilerParams(
            dimension_semantics=("parallel",)),
    )(x2d, packed)

    # Drop batch padding and the lane padding of the head output.
    return out_pad[:B, :n_out]


def _init_params(key, num_sensors, hidden_units, n_out=10):
    """PyTorch-default uniform(-1/sqrt(H), 1/sqrt(H)) init, deterministic."""
    H = hidden_units
    k = 1.0 / np.sqrt(H)
    shapes = {
        "w_ih_l0": (4 * H, num_sensors),
        "w_hh_l0": (4 * H, H),
        "b_ih_l0": (4 * H,),
        "b_hh_l0": (4 * H,),
        "w_ih_l1": (4 * H, H),
        "w_hh_l1": (4 * H, H),
        "b_ih_l1": (4 * H,),
        "b_hh_l1": (4 * H,),
        "w_lin": (n_out, H),
        "b_lin": (n_out,),
    }
    params = {}
    for name, shape in shapes.items():
        key, sub = jax.random.split(key)
        params[name] = jax.random.uniform(sub, shape, jnp.float32, minval=-k, maxval=k)
    return params


def _reference_forward(x, params):
    """Pure-JAX reference mirroring the PyTorch module (both LSTM layers computed)."""
    B, T, F = x.shape
    H = params["w_hh_l0"].shape[1]

    def cell(xt, h, c, wih, whh, bih, bhh):
        gates = xt @ wih.T + bih + h @ whh.T + bhh
        i, f, g, o = jnp.split(gates, 4, axis=-1)
        i, f, o = jax.nn.sigmoid(i), jax.nn.sigmoid(f), jax.nn.sigmoid(o)
        g = jnp.tanh(g)
        c = f * c + i * g
        h = o * jnp.tanh(c)
        return h, c

    h0 = c0 = h1 = c1 = jnp.zeros((B, H), jnp.float32)
    for t in range(T):
        h0, c0 = cell(x[:, t, :], h0, c0, params["w_ih_l0"], params["w_hh_l0"],
                      params["b_ih_l0"], params["b_hh_l0"])
        h1, c1 = cell(h0, h1, c1, params["w_ih_l1"], params["w_hh_l1"],
                      params["b_ih_l1"], params["b_hh_l1"])
    # Module returns linear(hn[0]) -> layer-0 final hidden state.
    return h0 @ params["w_lin"].T + params["b_lin"]


if __name__ == "__main__":
    num_sensors = 4     # features
    hidden_units = 32
    batch, seq = 2, 8

    key = jax.random.PRNGKey(0)
    key, kx = jax.random.split(key)
    x = jax.random.normal(kx, (batch, seq, num_sensors), jnp.float32)
    params = _init_params(key, num_sensors, hidden_units)

    out = shallow_regression_lstm_forward(x, params)
    out = jax.block_until_ready(out)

    ref = _reference_forward(x, params)
    np.testing.assert_allclose(np.asarray(out), np.asarray(ref), rtol=1e-5, atol=1e-5)
    assert out.shape == (batch, 10)
    print("KERNEL_OK")
</pallas_src>

<mosaic_0001>
module attributes {stable_mosaic.version = 11 : i64} {
  func.func @kernel(%arg0: i32, %arg1: memref<1x64x8xf32, #tpu.memory_space<vmem>>, %arg2: memref<80x128xf32, #tpu.memory_space<vmem>>, %arg3: memref<8x128xf32, #tpu.memory_space<vmem>>) attributes {dimension_semantics = [#tpu.dimension_semantics<parallel>], iteration_bounds = array<i64: 1>, scalar_prefetch = 0 : i64, scratch_operands = 0 : i64, tpu.core_type = #tpu.core_type<tc>, window_params = [{transform_indices = @transform_0, window_bounds = array<i64: 1, 64, 8>}, {pipeline_mode = #tpu.pipeline_mode<synchronous>, transform_indices = @transform_1, window_bounds = array<i64: 80, 128>}, {transform_indices = @transform_2, window_bounds = array<i64: 8, 128>}]} {
    %c0 = arith.constant 0 : index
    %c0_0 = arith.constant 0 : index
    %0 = vector.load %arg2[%c0, %c0_0] : memref<80x128xf32, #tpu.memory_space<vmem>>, vector<8x128xf32>
    %c8 = arith.constant 8 : index
    %c0_1 = arith.constant 0 : index
    %1 = vector.load %arg2[%c8, %c0_1] : memref<80x128xf32, #tpu.memory_space<vmem>>, vector<32x128xf32>
    %c40 = arith.constant 40 : index
    %c0_2 = arith.constant 0 : index
    %2 = vector.load %arg2[%c40, %c0_2] : memref<80x128xf32, #tpu.memory_space<vmem>>, vector<32x128xf32>
    %c72 = arith.constant 72 : index
    %c0_3 = arith.constant 0 : index
    %3 = vector.load %arg2[%c72, %c0_3] : memref<80x128xf32, #tpu.memory_space<vmem>>, vector<1x128xf32>
    %c0_4 = arith.constant 0 : index
    %c0_5 = arith.constant 0 : index
    %c0_6 = arith.constant 0 : index
    %4 = vector.load %arg1[%c0_4, %c0_5, %c0_6] : memref<1x64x8xf32, #tpu.memory_space<vmem>>, vector<1x64x8xf32>
    %5 = vector.shape_cast %4 : vector<1x64x8xf32> to vector<64x8xf32>
    %cst = arith.constant dense<0.000000e+00> : vector<64x128xf32>
    %6 = tpu.matmul %5, %0, %cst {dimension_numbers = #tpu.dot_dimension_numbers<[1], [0], [0], [1], [0, 0, 1, 1], [], []>} : vector<64x8xf32>, vector<8x128xf32>, vector<64x128xf32> -> vector<64x128xf32>
    %7 = tpu.iota {dimensions = array<i32: 1>} : vector<8x128xi32>
    %c64_i32 = arith.constant 64 : i32
    %8 = vector.broadcast %c64_i32 : i32 to vector<8x128xi32>
    %9 = arith.cmpi sge, %7, %8 : vector<8x128xi32>
    %c96_i32 = arith.constant 96 : i32
    %10 = vector.broadcast %c96_i32 : i32 to vector<8x128xi32>
    %11 = arith.cmpi slt, %7, %10 : vector<8x128xi32>
    %12 = arith.andi %9, %11 : vector<8x128xi1>
    %cst_7 = arith.constant 0.000000e+00 : f32
    %13 = vector.broadcast %cst_7 : f32 to vector<8x32xf32>
    %cst_8 = arith.constant 0.000000e+00 : f32
    %14 = vector.broadcast %cst_8 : f32 to vector<8x32xf32>
    %15 = vector.extract_strided_slice %6 {offsets = [0, 0], sizes = [8, 128], strides = [1, 1]} : vector<64x128xf32> to vector<8x128xf32>
    %cst_9 = arith.constant dense<0.000000e+00> : vector<8x128xf32>
    %16 = tpu.matmul %13, %1, %cst_9 {dimension_numbers = #tpu.dot_dimension_numbers<[1], [0], [0], [1], [0, 0, 1, 1], [], []>} : vector<8x32xf32>, vector<32x128xf32>, vector<8x128xf32> -> vector<8x128xf32>
    %17 = arith.addf %15, %16 : vector<8x128xf32>
    %18 = math.tanh %17 : vector<8x128xf32>
    %19 = arith.negf %17 : vector<8x128xf32>
    %20 = math.exp %19 : vector<8x128xf32>
    %cst_10 = arith.constant 1.000000e+00 : f32
    %21 = vector.broadcast %cst_10 : f32 to vector<8x128xf32>
    %22 = arith.addf %21, %20 : vector<8x128xf32>
    %23 = arith.divf %21, %22 : vector<8x128xf32>
    %24 = arith.select %12, %18, %23 : vector<8x128xi1>, vector<8x128xf32>
    %25 = vector.extract_strided_slice %24 {offsets = [0, 0], sizes = [8, 32], strides = [1, 1]} : vector<8x128xf32> to vector<8x32xf32>
    %26 = vector.extract_strided_slice %24 {offsets = [0, 32], sizes = [8, 32], strides = [1, 1]} : vector<8x128xf32> to vector<8x32xf32>
    %27 = vector.extract_strided_slice %24 {offsets = [0, 64], sizes = [8, 32], strides = [1, 1]} : vector<8x128xf32> to vector<8x32xf32>
    %28 = vector.extract_strided_slice %24 {offsets = [0, 96], sizes = [8, 32], strides = [1, 1]} : vector<8x128xf32> to vector<8x32xf32>
    %29 = arith.mulf %26, %14 : vector<8x32xf32>
    %30 = arith.mulf %25, %27 : vector<8x32xf32>
    %31 = arith.addf %29, %30 : vector<8x32xf32>
    %32 = math.tanh %31 : vector<8x32xf32>
    %33 = arith.mulf %28, %32 : vector<8x32xf32>
    %34 = vector.extract_strided_slice %6 {offsets = [8, 0], sizes = [8, 128], strides = [1, 1]} : vector<64x128xf32> to vector<8x128xf32>
    %cst_11 = arith.constant dense<0.000000e+00> : vector<8x128xf32>
    %35 = tpu.matmul %33, %1, %cst_11 {dimension_numbers = #tpu.dot_dimension_numbers<[1], [0], [0], [1], [0, 0, 1, 1], [], []>} : vector<8x32xf32>, vector<32x128xf32>, vector<8x128xf32> -> vector<8x128xf32>
    %36 = arith.addf %34, %35 : vector<8x128xf32>
    %37 = math.tanh %36 : vector<8x128xf32>
    %38 = arith.negf %36 : vector<8x128xf32>
    %39 = math.exp %38 : vector<8x128xf32>
    %cst_12 = arith.constant 1.000000e+00 : f32
    %40 = vector.broadcast %cst_12 : f32 to vector<8x128xf32>
    %41 = arith.addf %40, %39 : vector<8x128xf32>
    %42 = arith.divf %40, %41 : vector<8x128xf32>
    %43 = arith.select %12, %37, %42 : vector<8x128xi1>, vector<8x128xf32>
    %44 = vector.extract_strided_slice %43 {offsets = [0, 0], sizes = [8, 32], strides = [1, 1]} : vector<8x128xf32> to vector<8x32xf32>
    %45 = vector.extract_strided_slice %43 {offsets = [0, 32], sizes = [8, 32], strides = [1, 1]} : vector<8x128xf32> to vector<8x32xf32>
    %46 = vector.extract_strided_slice %43 {offsets = [0, 64], sizes = [8, 32], strides = [1, 1]} : vector<8x128xf32> to vector<8x32xf32>
    %47 = vector.extract_strided_slice %43 {offsets = [0, 96], sizes = [8, 32], strides = [1, 1]} : vector<8x128xf32> to vector<8x32xf32>
    %48 = arith.mulf %45, %31 : vector<8x32xf32>
    %49 = arith.mulf %44, %46 : vector<8x32xf32>
    %50 = arith.addf %48, %49 : vector<8x32xf32>
    %51 = math.tanh %50 : vector<8x32xf32>
    %52 = arith.mulf %47, %51 : vector<8x32xf32>
    %53 = vector.extract_strided_slice %6 {offsets = [16, 0], sizes = [8, 128], strides = [1, 1]} : vector<64x128xf32> to vector<8x128xf32>
    %cst_13 = arith.constant dense<0.000000e+00> : vector<8x128xf32>
    %54 = tpu.matmul %52, %1, %cst_13 {dimension_numbers = #tpu.dot_dimension_numbers<[1], [0], [0], [1], [0, 0, 1, 1], [], []>} : vector<8x32xf32>, vector<32x128xf32>, vector<8x128xf32> -> vector<8x128xf32>
    %55 = arith.addf %53, %54 : vector<8x128xf32>
    %56 = math.tanh %55 : vector<8x128xf32>
    %57 = arith.negf %55 : vector<8x128xf32>
    %58 = math.exp %57 : vector<8x128xf32>
    %cst_14 = arith.constant 1.000000e+00 : f32
    %59 = vector.broadcast %cst_14 : f32 to vector<8x128xf32>
    %60 = arith.addf %59, %58 : vector<8x128xf32>
    %61 = arith.divf %59, %60 : vector<8x128xf32>
    %62 = arith.select %12, %56, %61 : vector<8x128xi1>, vector<8x128xf32>
    %63 = vector.extract_strided_slice %62 {offsets = [0, 0], sizes = [8, 32], strides = [1, 1]} : vector<8x128xf32> to vector<8x32xf32>
    %64 = vector.extract_strided_slice %62 {offsets = [0, 32], sizes = [8, 32], strides = [1, 1]} : vector<8x128xf32> to vector<8x32xf32>
    %65 = vector.extract_strided_slice %62 {offsets = [0, 64], sizes = [8, 32], strides = [1, 1]} : vector<8x128xf32> to vector<8x32xf32>
    %66 = vector.extract_strided_slice %62 {offsets = [0, 96], sizes = [8, 32], strides = [1, 1]} : vector<8x128xf32> to vector<8x32xf32>
    %67 = arith.mulf %64, %50 : vector<8x32xf32>
    %68 = arith.mulf %63, %65 : vector<8x32xf32>
    %69 = arith.addf %67, %68 : vector<8x32xf32>
    %70 = math.tanh %69 : vector<8x32xf32>
    %71 = arith.mulf %66, %70 : vector<8x32xf32>
    %72 = vector.extract_strided_slice %6 {offsets = [24, 0], sizes = [8, 128], strides = [1, 1]} : vector<64x128xf32> to vector<8x128xf32>
    %cst_15 = arith.constant dense<0.000000e+00> : vector<8x128xf32>
    %73 = tpu.matmul %71, %1, %cst_15 {dimension_numbers = #tpu.dot_dimension_numbers<[1], [0], [0], [1], [0, 0, 1, 1], [], []>} : vector<8x32xf32>, vector<32x128xf32>, vector<8x128xf32> -> vector<8x128xf32>
    %74 = arith.addf %72, %73 : vector<8x128xf32>
    %75 = math.tanh %74 : vector<8x128xf32>
    %76 = arith.negf %74 : vector<8x128xf32>
    %77 = math.exp %76 : vector<8x128xf32>
    %cst_16 = arith.constant 1.000000e+00 : f32
    %78 = vector.broadcast %cst_16 : f32 to vector<8x128xf32>
    %79 = arith.addf %78, %77 : vector<8x128xf32>
    %80 = arith.divf %78, %79 : vector<8x128xf32>
    %81 = arith.select %12, %75, %80 : vector<8x128xi1>, vector<8x128xf32>
    %82 = vector.extract_strided_slice %81 {offsets = [0, 0], sizes = [8, 32], strides = [1, 1]} : vector<8x128xf32> to vector<8x32xf32>
    %83 = vector.extract_strided_slice %81 {offsets = [0, 32], sizes = [8, 32], strides = [1, 1]} : vector<8x128xf32> to vector<8x32xf32>
    %84 = vector.extract_strided_slice %81 {offsets = [0, 64], sizes = [8, 32], strides = [1, 1]} : vector<8x128xf32> to vector<8x32xf32>
    %85 = vector.extract_strided_slice %81 {offsets = [0, 96], sizes = [8, 32], strides = [1, 1]} : vector<8x128xf32> to vector<8x32xf32>
    %86 = arith.mulf %83, %69 : vector<8x32xf32>
    %87 = arith.mulf %82, %84 : vector<8x32xf32>
    %88 = arith.addf %86, %87 : vector<8x32xf32>
    %89 = math.tanh %88 : vector<8x32xf32>
    %90 = arith.mulf %85, %89 : vector<8x32xf32>
    %91 = vector.extract_strided_slice %6 {offsets = [32, 0], sizes = [8, 128], strides = [1, 1]} : vector<64x128xf32> to vector<8x128xf32>
    %cst_17 = arith.constant dense<0.000000e+00> : vector<8x128xf32>
    %92 = tpu.matmul %90, %1, %cst_17 {dimension_numbers = #tpu.dot_dimension_numbers<[1], [0], [0], [1], [0, 0, 1, 1], [], []>} : vector<8x32xf32>, vector<32x128xf32>, vector<8x128xf32> -> vector<8x128xf32>
    %93 = arith.addf %91, %92 : vector<8x128xf32>
    %94 = math.tanh %93 : vector<8x128xf32>
    %95 = arith.negf %93 : vector<8x128xf32>
    %96 = math.exp %95 : vector<8x128xf32>
    %cst_18 = arith.constant 1.000000e+00 : f32
    %97 = vector.broadcast %cst_18 : f32 to vector<8x128xf32>
    %98 = arith.addf %97, %96 : vector<8x128xf32>
    %99 = arith.divf %97, %98 : vector<8x128xf32>
    %100 = arith.select %12, %94, %99 : vector<8x128xi1>, vector<8x128xf32>
    %101 = vector.extract_strided_slice %100 {offsets = [0, 0], sizes = [8, 32], strides = [1, 1]} : vector<8x128xf32> to vector<8x32xf32>
    %102 = vector.extract_strided_slice %100 {offsets = [0, 32], sizes = [8, 32], strides = [1, 1]} : vector<8x128xf32> to vector<8x32xf32>
    %103 = vector.extract_strided_slice %100 {offsets = [0, 64], sizes = [8, 32], strides = [1, 1]} : vector<8x128xf32> to vector<8x32xf32>
    %104 = vector.extract_strided_slice %100 {offsets = [0, 96], sizes = [8, 32], strides = [1, 1]} : vector<8x128xf32> to vector<8x32xf32>
    %105 = arith.mulf %102, %88 : vector<8x32xf32>
    %106 = arith.mulf %101, %103 : vector<8x32xf32>
    %107 = arith.addf %105, %106 : vector<8x32xf32>
    %108 = math.tanh %107 : vector<8x32xf32>
    %109 = arith.mulf %104, %108 : vector<8x32xf32>
    %110 = vector.extract_strided_slice %6 {offsets = [40, 0], sizes = [8, 128], strides = [1, 1]} : vector<64x128xf32> to vector<8x128xf32>
    %cst_19 = arith.constant dense<0.000000e+00> : vector<8x128xf32>
    %111 = tpu.matmul %109, %1, %cst_19 {dimension_numbers = #tpu.dot_dimension_numbers<[1], [0], [0], [1], [0, 0, 1, 1], [], []>} : vector<8x32xf32>, vector<32x128xf32>, vector<8x128xf32> -> vector<8x128xf32>
    %112 = arith.addf %110, %111 : vector<8x128xf32>
    %113 = math.tanh %112 : vector<8x128xf32>
    %114 = arith.negf %112 : vector<8x128xf32>
    %115 = math.exp %114 : vector<8x128xf32>
    %cst_20 = arith.constant 1.000000e+00 : f32
    %116 = vector.broadcast %cst_20 : f32 to vector<8x128xf32>
    %117 = arith.addf %116, %115 : vector<8x128xf32>
    %118 = arith.divf %116, %117 : vector<8x128xf32>
    %119 = arith.select %12, %113, %118 : vector<8x128xi1>, vector<8x128xf32>
    %120 = vector.extract_strided_slice %119 {offsets = [0, 0], sizes = [8, 32], strides = [1, 1]} : vector<8x128xf32> to vector<8x32xf32>
    %121 = vector.extract_strided_slice %119 {offsets = [0, 32], sizes = [8, 32], strides = [1, 1]} : vector<8x128xf32> to vector<8x32xf32>
    %122 = vector.extract_strided_slice %119 {offsets = [0, 64], sizes = [8, 32], strides = [1, 1]} : vector<8x128xf32> to vector<8x32xf32>
    %123 = vector.extract_strided_slice %119 {offsets = [0, 96], sizes = [8, 32], strides = [1, 1]} : vector<8x128xf32> to vector<8x32xf32>
    %124 = arith.mulf %121, %107 : vector<8x32xf32>
    %125 = arith.mulf %120, %122 : vector<8x32xf32>
    %126 = arith.addf %124, %125 : vector<8x32xf32>
    %127 = math.tanh %126 : vector<8x32xf32>
    %128 = arith.mulf %123, %127 : vector<8x32xf32>
    %129 = vector.extract_strided_slice %6 {offsets = [48, 0], sizes = [8, 128], strides = [1, 1]} : vector<64x128xf32> to vector<8x128xf32>
    %cst_21 = arith.constant dense<0.000000e+00> : vector<8x128xf32>
    %130 = tpu.matmul %128, %1, %cst_21 {dimension_numbers = #tpu.dot_dimension_numbers<[1], [0], [0], [1], [0, 0, 1, 1], [], []>} : vector<8x32xf32>, vector<32x128xf32>, vector<8x128xf32> -> vector<8x128xf32>
    %131 = arith.addf %129, %130 : vector<8x128xf32>
    %132 = math.tanh %131 : vector<8x128xf32>
    %133 = arith.negf %131 : vector<8x128xf32>
    %134 = math.exp %133 : vector<8x128xf32>
    %cst_22 = arith.constant 1.000000e+00 : f32
    %135 = vector.broadcast %cst_22 : f32 to vector<8x128xf32>
    %136 = arith.addf %135, %134 : vector<8x128xf32>
    %137 = arith.divf %135, %136 : vector<8x128xf32>
    %138 = arith.select %12, %132, %137 : vector<8x128xi1>, vector<8x128xf32>
    %139 = vector.extract_strided_slice %138 {offsets = [0, 0], sizes = [8, 32], strides = [1, 1]} : vector<8x128xf32> to vector<8x32xf32>
    %140 = vector.extract_strided_slice %138 {offsets = [0, 32], sizes = [8, 32], strides = [1, 1]} : vector<8x128xf32> to vector<8x32xf32>
    %141 = vector.extract_strided_slice %138 {offsets = [0, 64], sizes = [8, 32], strides = [1, 1]} : vector<8x128xf32> to vector<8x32xf32>
    %142 = vector.extract_strided_slice %138 {offsets = [0, 96], sizes = [8, 32], strides = [1, 1]} : vector<8x128xf32> to vector<8x32xf32>
    %143 = arith.mulf %140, %126 : vector<8x32xf32>
    %144 = arith.mulf %139, %141 : vector<8x32xf32>
    %145 = arith.addf %143, %144 : vector<8x32xf32>
    %146 = math.tanh %145 : vector<8x32xf32>
    %147 = arith.mulf %142, %146 : vector<8x32xf32>
    %148 = vector.extract_strided_slice %6 {offsets = [56, 0], sizes = [8, 128], strides = [1, 1]} : vector<64x128xf32> to vector<8x128xf32>
    %cst_23 = arith.constant dense<0.000000e+00> : vector<8x128xf32>
    %149 = tpu.matmul %147, %1, %cst_23 {dimension_numbers = #tpu.dot_dimension_numbers<[1], [0], [0], [1], [0, 0, 1, 1], [], []>} : vector<8x32xf32>, vector<32x128xf32>, vector<8x128xf32> -> vector<8x128xf32>
    %150 = arith.addf %148, %149 : vector<8x128xf32>
    %151 = math.tanh %150 : vector<8x128xf32>
    %152 = arith.negf %150 : vector<8x128xf32>
    %153 = math.exp %152 : vector<8x128xf32>
    %cst_24 = arith.constant 1.000000e+00 : f32
    %154 = vector.broadcast %cst_24 : f32 to vector<8x128xf32>
    %155 = arith.addf %154, %153 : vector<8x128xf32>
    %156 = arith.divf %154, %155 : vector<8x128xf32>
    %157 = arith.select %12, %151, %156 : vector<8x128xi1>, vector<8x128xf32>
    %158 = vector.extract_strided_slice %157 {offsets = [0, 0], sizes = [8, 32], strides = [1, 1]} : vector<8x128xf32> to vector<8x32xf32>
    %159 = vector.extract_strided_slice %157 {offsets = [0, 32], sizes = [8, 32], strides = [1, 1]} : vector<8x128xf32> to vector<8x32xf32>
    %160 = vector.extract_strided_slice %157 {offsets = [0, 64], sizes = [8, 32], strides = [1, 1]} : vector<8x128xf32> to vector<8x32xf32>
    %161 = vector.extract_strided_slice %157 {offsets = [0, 96], sizes = [8, 32], strides = [1, 1]} : vector<8x128xf32> to vector<8x32xf32>
    %162 = arith.mulf %159, %145 : vector<8x32xf32>
    %163 = arith.mulf %158, %160 : vector<8x32xf32>
    %164 = arith.addf %162, %163 : vector<8x32xf32>
    %165 = math.tanh %164 : vector<8x32xf32>
    %166 = arith.mulf %161, %165 : vector<8x32xf32>
    %cst_25 = arith.constant dense<0.000000e+00> : vector<8x128xf32>
    %167 = tpu.matmul %166, %2, %cst_25 {dimension_numbers = #tpu.dot_dimension_numbers<[1], [0], [0], [1], [0, 0, 1, 1], [], []>} : vector<8x32xf32>, vector<32x128xf32>, vector<8x128xf32> -> vector<8x128xf32>
    %168 = vector.broadcast %3 : vector<1x128xf32> to vector<8x128xf32>
    %169 = arith.addf %167, %168 : vector<8x128xf32>
    %c0_26 = arith.constant 0 : index
    %c0_27 = arith.constant 0 : index
    %170 = vector.load %arg3[%c0_26, %c0_27] : memref<8x128xf32, #tpu.memory_space<vmem>>, vector<8x128xf32>
    tpu.vector_store %arg3[%c0_26, %c0_27], %169 {strides = array<i32>} : memref<8x128xf32, #tpu.memory_space<vmem>>, vector<8x128xf32>,
    return
  }
  func.func @transform_0(%arg0: i32) -> (i32, i32, i32) {
    %c0_i32 = arith.constant 0 : i32
    %c0_i32_0 = arith.constant 0 : i32
    %c0_i32_1 = arith.constant 0 : i32
    return %arg0, %c0_i32, %c0_i32_0 : i32, i32, i32
  }
  func.func @transform_1(%arg0: i32) -> (i32, i32) {
    %c0_i32 = arith.constant 0 : i32
    %c0_i32_0 = arith.constant 0 : i32
    %c0_i32_1 = arith.constant 0 : i32
    return %c0_i32, %c0_i32_0 : i32, i32
  }
  func.func @transform_2(%arg0: i32) -> (i32, i32) {
    %c0_i32 = arith.constant 0 : i32
    %c0_i32_0 = arith.constant 0 : i32
    return %arg0, %c0_i32 : i32, i32
  }
}

</mosaic_0001>

<llo_original>
// kernel: tpu_custom_call.1
$region0: #{tpu_custom_call.1}
  #allocation0 [shape = 'u32[]', space=smem, size = 0x4, offset = 0x4, fixed_abs, tag = 'smem constant byte address 0x4 - core index']
  #allocation1 [shape = 'u32[144,128]{1,0:T(1,128)}', space=vmem, size = 0x12000, scoped, tag = 'internal scratch']
  %s0 = inlined_call_operand.vmem [shape: f32[1,64,8], index: 0, kind: input, shape index: {}]
  %s1 = inlined_call_operand.hbm [shape: f32[80,128], index: 1, kind: input, shape index: {}]
  %s2 = inlined_call_operand.hbm [shape: f32[8,128], index: 2, kind: output, shape index: {}]
  %s3 = sld [smem:[#allocation0]]
  $region22: #{tpu_custom_call.1} parent=0
    _
  %s5 = ssub.s32 1, %s3
  %s6 = scalar_select 0, %s5, %s3
  $region1: #{tpu_custom_call.1} parent=0
    #allocation2 [shape = 'u8[40960]{0}', space=vmem, size = 0xa000, scoped, tag = 'input window, operand 1, single buffered']
    #allocation3 [shape = 's32[1]{0}', space=sflag, size = 0x4, scoped, tag = 'scoped memory for tpu_custom_call.1']
    #allocation4 [shape = 's32[1]{0}', space=sflag, size = 0x4, scoped, tag = 'scoped memory for tpu_custom_call.1']
    #allocation5 [shape = 'u8[4096]{0}', space=vmem, size = 0x1000, scoped, tag = 'output window, operand 0, single buffered']
    %7 = vsyncpa [#allocation3], 0
    %8 = vsyncpa [#allocation4], 0
    // Predicated region
    $region2: #{tpu_custom_call.1} parent=1 // pred_check
      _
    $region3: #{tpu_custom_call.1} parent=1 // pred_check_branch
      %10 = sbr.rel (0) target = $region5
    $region4: #{tpu_custom_call.1} parent=1 // pred_region
      _
    $region5: #{tpu_custom_call.1} parent=1 // pred_fallthru
      _
    // Predicated region
    $region6: #{tpu_custom_call.1} parent=1 // pred_check
      _
    $region7: #{tpu_custom_call.1} parent=1 // pred_check_branch
      %12 = sbr.rel (0) target = $region9
    $region8: #{tpu_custom_call.1} parent=1 // pred_region
      %s14 = ssub.s32 1280, 1280
      %15 = vsyncadd [#allocation3], %s14
      %s16 = sshll.u32 [#allocation2], 4
      %s17 = int_to_ptr.vmem [resolvable:$true] %s16
      %22 = dma.hbm_to_vmem [thread:$0]  %s1, 1280, %s17, [#allocation3], 128, 128, 8
    $region9: #{tpu_custom_call.1} parent=1 // pred_fallthru
      _
    // Predicated region
    $region10: #{tpu_custom_call.1} parent=1 // pred_check
      _
    $region11: #{tpu_custom_call.1} parent=1 // pred_check_branch
      %24 = sbr.rel (0) target = $region13
    $region12: #{tpu_custom_call.1} parent=1 // pred_region
      %25 = dma.done [#allocation3], 1280
    $region13: #{tpu_custom_call.1} parent=1 // pred_fallthru
      _
    %v26 = vld [vmem:[#allocation2] sm:$0xff]
    %v27 = vld [vmem:[#allocation2 + $0x8] sm:$0xff]
    %v28 = vld [vmem:[#allocation2 + $0x10] sm:$0xff]
    %v29 = vld [vmem:[#allocation2 + $0x18] sm:$0xff]
    %v30 = vld [vmem:[#allocation2 + $0x20] sm:$0xff]
    %v31 = vld [vmem:[#allocation2 + $0x28] sm:$0xff]
    %v32 = vld [vmem:[#allocation2 + $0x30] sm:$0xff]
    %v33 = vld [vmem:[#allocation2 + $0x38] sm:$0xff]
    %v34 = vld [vmem:[#allocation2 + $0x40] sm:$0xff]
    %v35 = vld [vmem:[#allocation2 + $0x48] sm:$0x1]
    %v36 = vld [vmem:[%s0] sm:$0xff]
    %v37 = vld [vmem:[%s0 + $0x8] sm:$0xff]
    %v38 = vld [vmem:[%s0 + $0x10] sm:$0xff]
    %v39 = vld [vmem:[%s0 + $0x18] sm:$0xff]
    %v40 = vld [vmem:[%s0 + $0x20] sm:$0xff]
    %v41 = vld [vmem:[%s0 + $0x28] sm:$0xff]
    %v42 = vld [vmem:[%s0 + $0x30] sm:$0xff]
    %v43 = vld [vmem:[%s0 + $0x38] sm:$0xff]
    %vm44 = vcmask 64512
    %v46 = vsel %vm44, %v36, 0
    %v49 = vsel %vm44, %v37, 0
    %v52 = vsel %vm44, %v38, 0
    %v55 = vsel %vm44, %v39, 0
    %v58 = vsel %vm44, %v40, 0
    %v61 = vsel %vm44, %v41, 0
    %v64 = vsel %vm44, %v42, 0
    %v67 = vsel %vm44, %v43, 0
    %69 = vmatprep.subr.mxu0 0.0
    %70 = vmatpush1.msra.mxu0 %v26
    %71 = vmatprep.subr.mxu0 0.0
    %72 = vmatpush1.msra.mxu0 0.0
    %73 = vmatprep.subr.mxu0 0.0
    %74 = vmatpush1.msra.mxu0 0.0
    %75 = vmatprep.subr.mxu0 0.0
    %76 = vmatpush1.msra.mxu0 0.0
    %77 = vmatprep.subr.mxu0 0.0
    %78 = vmatpush1.msra.mxu0 0.0
    %79 = vmatprep.subr.mxu0 0.0
    %80 = vmatpush1.msra.mxu0 0.0
    %81 = vmatprep.subr.mxu0 0.0
    %82 = vmatpush1.msra.mxu0 0.0
    %83 = vmatprep.subr.mxu0 0.0
    %84 = vmatpush1.msra.mxu0 0.0
    %85 = vmatprep.subr.mxu0 0.0
    %86 = vmatpush1.msra.mxu0 0.0
    %87 = vmatprep.subr.mxu0 0.0
    %88 = vmatpush1.msra.mxu0 0.0
    %89 = vmatprep.subr.mxu0 0.0
    %90 = vmatpush1.msra.mxu0 0.0
    %91 = vmatprep.subr.mxu0 0.0
    %92 = vmatpush1.msra.mxu0 0.0
    %93 = vmatprep.subr.mxu0 0.0
    %94 = vmatpush1.msra.mxu0 0.0
    %95 = vmatprep.subr.mxu0 0.0
    %96 = vmatpush1.msra.mxu0 0.0
    %97 = vmatprep.subr.mxu0 0.0
    %98 = vmatpush1.msra.mxu0 0.0
    %99 = vmatprep.subr.mxu0 0.0
    %100 = vmatpush1.msra.mxu0 0.0
    %101 = vmatprep.subr.mxu0 0.0
    %102 = vmatpush1.msra.mxu0 0.0
    %103 = vmatprep.subr.mxu0 0.0
    %104 = vmatpush1.msra.mxu0 0.0
    %105 = vmatprep.subr.mxu0 0.0
    %106 = vmatpush1.msra.mxu0 0.0
    %107 = vmatprep.subr.mxu0 0.0
    %108 = vmatpush1.msra.mxu0 0.0
    %109 = vmatprep.subr.mxu0 0.0
    %110 = vmatpush1.msra.mxu0 0.0
    %111 = vmatprep.subr.mxu0 0.0
    %112 = vmatpush1.msra.mxu0 0.0
    %113 = vmatprep.subr.mxu0 0.0
    %114 = vmatpush1.msra.mxu0 0.0
    %115 = vmatprep.subr.mxu0 0.0
    %116 = vmatpush1.msra.mxu0 0.0
    %117 = vmatprep.subr.mxu0 0.0
    %118 = vmatpush1.msra.mxu0 0.0
    %119 = vmatprep.subr.mxu0 0.0
    %120 = vmatpush1.msra.mxu0 0.0
    %121 = vmatprep.subr.mxu0 0.0
    %122 = vmatpush1.msra.mxu0 0.0
    %123 = vmatprep.subr.mxu0 0.0
    %124 = vmatpush1.msra.mxu0 0.0
    %125 = vmatprep.subr.mxu0 0.0
    %126 = vmatpush1.msra.mxu0 0.0
    %127 = vmatprep.subr.mxu0 0.0
    %128 = vmatpush1.msra.mxu0 0.0
    %129 = vmatprep.subr.mxu0 0.0
    %130 = vmatpush1.msra.mxu0 0.0
    %131 = vmatprep.subr.mxu0 0.0
    %132 = vmatpush1.msra.mxu0 0.0
    %133 = vmatprep.mubr.f32.mxu0 0.0
    %134 = vmatmul.mubr.f32.gmra.mrb[0].mxu0 %v46
    %v135 = vpop.f32.mrb[0].mxu0
    %v136 = vadd.f32 0.0, %v135
    %v137 = vpop.f32.mrb[0].mxu0
    %138 = vmatprep.mubr.f32.mxu0 0.0
    %139 = vmatmul.mubr.f32.gmra.mrb[0].mxu0 %v49
    %v140 = vpop.f32.mrb[0].mxu0
    %v141 = vadd.f32 0.0, %v140
    %v142 = vpop.f32.mrb[0].mxu0
    %143 = vmatprep.mubr.f32.mxu0 0.0
    %144 = vmatmul.mubr.f32.gmra.mrb[0].mxu0 %v52
    %v145 = vpop.f32.mrb[0].mxu0
    %v146 = vadd.f32 0.0, %v145
    %v147 = vpop.f32.mrb[0].mxu0
    %148 = vmatprep.mubr.f32.mxu0 0.0
    %149 = vmatmul.mubr.f32.gmra.mrb[0].mxu0 %v55
    %v150 = vpop.f32.mrb[0].mxu0
    %v151 = vadd.f32 0.0, %v150
    %v152 = vpop.f32.mrb[0].mxu0
    %153 = vmatprep.mubr.f32.mxu0 0.0
    %154 = vmatmul.mubr.f32.gmra.mrb[0].mxu0 %v58
    %v155 = vpop.f32.mrb[0].mxu0
    %v156 = vadd.f32 0.0, %v155
    %v157 = vpop.f32.mrb[0].mxu0
    %158 = vmatprep.mubr.f32.mxu0 0.0
    %159 = vmatmul.mubr.f32.gmra.mrb[0].mxu0 %v61
    %v160 = vpop.f32.mrb[0].mxu0
    %v161 = vadd.f32 0.0, %v160
    %v162 = vpop.f32.mrb[0].mxu0
    %163 = vmatprep.mubr.f32.mxu0 0.0
    %164 = vmatmul.mubr.f32.gmra.mrb[0].mxu0 %v64
    %v165 = vpop.f32.mrb[0].mxu0
    %v166 = vadd.f32 0.0, %v165
    %v167 = vpop.f32.mrb[0].mxu0
    %168 = vmatprep.mubr.f32.mxu0 0.0
    %169 = vmatmul.mubr.f32.gmra.mrb[0].mxu0 %v67
    %v170 = vpop.f32.mrb[0].mxu0
    %v171 = vadd.f32 0.0, %v170
    %v172 = vpop.f32.mrb[0].mxu0
    %173 = vdwg.mxu0
    %v174 = vlaneseq
    %v175 = vand.u32 %v174, 127
    %vm176 = vcmp.ge.s32.totalorder %v175, 64
    %vm177 = vcmp.lt.s32.totalorder %v175, 96
    %vm178 = vmand %vm176, %vm177
    %vm179 = vcmask 261120
    %v181 = vsel %vm179, 0.0, 0
    %183 = vmatprep.subr.mxu0 0.0
    %184 = vmatpush1.msra.mxu0 %v27
    %185 = vmatprep.subr.mxu0 0.0
    %186 = vmatpush1.msra.mxu0 %v28
    %187 = vmatprep.subr.mxu0 0.0
    %188 = vmatpush1.msra.mxu0 %v29
    %189 = vmatprep.subr.mxu0 0.0
    %190 = vmatpush1.msra.mxu0 %v30
    %191 = vmatprep.subr.mxu0 0.0
    %192 = vmatpush1.msra.mxu0 0.0
    %193 = vmatprep.subr.mxu0 0.0
    %194 = vmatpush1.msra.mxu0 0.0
    %195 = vmatprep.subr.mxu0 0.0
    %196 = vmatpush1.msra.mxu0 0.0
    %197 = vmatprep.subr.mxu0 0.0
    %198 = vmatpush1.msra.mxu0 0.0
    %199 = vmatprep.subr.mxu0 0.0
    %200 = vmatpush1.msra.mxu0 0.0
    %201 = vmatprep.subr.mxu0 0.0
    %202 = vmatpush1.msra.mxu0 0.0
    %203 = vmatprep.subr.mxu0 0.0
    %204 = vmatpush1.msra.mxu0 0.0
    %205 = vmatprep.subr.mxu0 0.0
    %206 = vmatpush1.msra.mxu0 0.0
    %207 = vmatprep.subr.mxu0 0.0
    %208 = vmatpush1.msra.mxu0 0.0
    %209 = vmatprep.subr.mxu0 0.0
    %210 = vmatpush1.msra.mxu0 0.0
    %211 = vmatprep.subr.mxu0 0.0
    %212 = vmatpush1.msra.mxu0 0.0
    %213 = vmatprep.subr.mxu0 0.0
    %214 = vmatpush1.msra.mxu0 0.0
    %215 = vmatprep.subr.mxu0 0.0
    %216 = vmatpush1.msra.mxu0 0.0
    %217 = vmatprep.subr.mxu0 0.0
    %218 = vmatpush1.msra.mxu0 0.0
    %219 = vmatprep.subr.mxu0 0.0
    %220 = vmatpush1.msra.mxu0 0.0
    %221 = vmatprep.subr.mxu0 0.0
    %222 = vmatpush1.msra.mxu0 0.0
    %223 = vmatprep.subr.mxu0 0.0
    %224 = vmatpush1.msra.mxu0 0.0
    %225 = vmatprep.subr.mxu0 0.0
    %226 = vmatpush1.msra.mxu0 0.0
    %227 = vmatprep.subr.mxu0 0.0
    %228 = vmatpush1.msra.mxu0 0.0
    %229 = vmatprep.subr.mxu0 0.0
    %230 = vmatpush1.msra.mxu0 0.0
    %231 = vmatprep.subr.mxu0 0.0
    %232 = vmatpush1.msra.mxu0 0.0
    %233 = vmatprep.subr.mxu0 0.0
    %234 = vmatpush1.msra.mxu0 0.0
    %235 = vmatprep.subr.mxu0 0.0
    %236 = vmatpush1.msra.mxu0 0.0
    %237 = vmatprep.subr.mxu0 0.0
    %238 = vmatpush1.msra.mxu0 0.0
    %239 = vmatprep.subr.mxu0 0.0
    %240 = vmatpush1.msra.mxu0 0.0
    %241 = vmatprep.subr.mxu0 0.0
    %242 = vmatpush1.msra.mxu0 0.0
    %243 = vmatprep.subr.mxu0 0.0
    %244 = vmatpush1.msra.mxu0 0.0
    %245 = vmatprep.subr.mxu0 0.0
    %246 = vmatpush1.msra.mxu0 0.0
    %247 = vmatprep.mubr.f32.mxu0 0.0
    %248 = vmatmul.mubr.f32.gmra.mrb[0].mxu0 %v181
    %v249 = vpop.f32.mrb[0].mxu0
    %v250 = vadd.f32 0.0, %v249
    %v251 = vpop.f32.mrb[0].mxu0
    %252 = vdwg.mxu0
    %v253 = vadd.f32 %v136, %v250
    %v254 = vtanh.pop %v253
    %v255 = vxor.u32 %v253, 2147483648
    %v256 = vmul.f32 %v255, 1.442695
    %v257 = vpow.pop %v256
    %v258 = vadd.f32 %v257, 1.0
    %v259 = vrcp.pop %v258
    %v260 = vmul.f32 1.0, %v259
    %v261 = vsel %vm178, %v254, %v260
    %v262 = vmul.f32 %v261, 0.0
    %264 = vrot.lane.b32.xlu0 %v261, 64
    %v265 = vpop.permute.xlu0 %264
    %v267 = vmul.f32 %v261, %v265
    %269 = vrot.lane.b32.xlu0 %v267, 32
    %v270 = vpop.permute.xlu0 %269
    %v272 = vadd.f32 %v262, %v270
    %v273 = vtanh.pop %v272
    %275 = vrot.lane.b32.xlu0 %v273, 64
    %v276 = vpop.permute.xlu0 %275
    %v278 = vmul.f32 %v261, %v276
    %280 = vrot.lane.b32.xlu0 %v278, 32
    %v281 = vpop.permute.xlu0 %280
    %v282 = vsel %vm179, %v281, 0
    %284 = vmatprep.subr.mxu0 0.0
    %285 = vmatpush1.msra.mxu0 %v27
    %286 = vmatprep.subr.mxu0 0.0
    %287 = vmatpush1.msra.mxu0 %v28
    %288 = vmatprep.subr.mxu0 0.0
    %289 = vmatpush1.msra.mxu0 %v29
    %290 = vmatprep.subr.mxu0 0.0
    %291 = vmatpush1.msra.mxu0 %v30
    %292 = vmatprep.subr.mxu0 0.0
    %293 = vmatpush1.msra.mxu0 0.0
    %294 = vmatprep.subr.mxu0 0.0
    %295 = vmatpush1.msra.mxu0 0.0
    %296 = vmatprep.subr.mxu0 0.0
    %297 = vmatpush1.msra.mxu0 0.0
    %298 = vmatprep.subr.mxu0 0.0
    %299 = vmatpush1.msra.mxu0 0.0
    %300 = vmatprep.subr.mxu0 0.0
    %301 = vmatpush1.msra.mxu0 0.0
    %302 = vmatprep.subr.mxu0 0.0
    %303 = vmatpush1.msra.mxu0 0.0
    %304 = vmatprep.subr.mxu0 0.0
    %305 = vmatpush1.msra.mxu0 0.0
    %306 = vmatprep.subr.mxu0 0.0
    %307 = vmatpush1.msra.mxu0 0.0
    %308 = vmatprep.subr.mxu0 0.0
    %309 = vmatpush1.msra.mxu0 0.0
    %310 = vmatprep.subr.mxu0 0.0
    %311 = vmatpush1.msra.mxu0 0.0
    %312 = vmatprep.subr.mxu0 0.0
    %313 = vmatpush1.msra.mxu0 0.0
    %314 = vmatprep.subr.mxu0 0.0
    %315 = vmatpush1.msra.mxu0 0.0
    %316 = vmatprep.subr.mxu0 0.0
    %317 = vmatpush1.msra.mxu0 0.0
    %318 = vmatprep.subr.mxu0 0.0
    %319 = vmatpush1.msra.mxu0 0.0
    %320 = vmatprep.subr.mxu0 0.0
    %321 = vmatpush1.msra.mxu0 0.0
    %322 = vmatprep.subr.mxu0 0.0
    %323 = vmatpush1.msra.mxu0 0.0
    %324 = vmatprep.subr.mxu0 0.0
    %325 = vmatpush1.msra.mxu0 0.0
    %326 = vmatprep.subr.mxu0 0.0
    %327 = vmatpush1.msra.mxu0 0.0
    %328 = vmatprep.subr.mxu0 0.0
    %329 = vmatpush1.msra.mxu0 0.0
    %330 = vmatprep.subr.mxu0 0.0
    %331 = vmatpush1.msra.mxu0 0.0
    %332 = vmatprep.subr.mxu0 0.0
    %333 = vmatpush1.msra.mxu0 0.0
    %334 = vmatprep.subr.mxu0 0.0
    %335 = vmatpush1.msra.mxu0 0.0
    %336 = vmatprep.subr.mxu0 0.0
    %337 = vmatpush1.msra.mxu0 0.0
    %338 = vmatprep.subr.mxu0 0.0
    %339 = vmatpush1.msra.mxu0 0.0
    %340 = vmatprep.subr.mxu0 0.0
    %341 = vmatpush1.msra.mxu0 0.0
    %342 = vmatprep.subr.mxu0 0.0
    %343 = vmatpush1.msra.mxu0 0.0
    %344 = vmatprep.subr.mxu0 0.0
    %345 = vmatpush1.msra.mxu0 0.0
    %346 = vmatprep.subr.mxu0 0.0
    %347 = vmatpush1.msra.mxu0 0.0
    %348 = vmatprep.mubr.f32.mxu0 0.0
    %349 = vmatmul.mubr.f32.gmra.mrb[0].mxu0 %v282
    %v350 = vpop.f32.mrb[0].mxu0
    %v351 = vadd.f32 0.0, %v350
    %v352 = vpop.f32.mrb[0].mxu0
    %353 = vdwg.mxu0
    %v354 = vadd.f32 %v141, %v351
    %v355 = vtanh.pop %v354
    %v356 = vxor.u32 %v354, 2147483648
    %v357 = vmul.f32 %v356, 1.442695
    %v358 = vpow.pop %v357
    %v359 = vadd.f32 %v358, 1.0
    %v360 = vrcp.pop %v359
    %v361 = vmul.f32 1.0, %v360
    %v362 = vsel %vm178, %v355, %v361
    %v363 = vmul.f32 %v362, %v272
    %365 = vrot.lane.b32.xlu0 %v362, 64
    %v366 = vpop.permute.xlu0 %365
    %v368 = vmul.f32 %v362, %v366
    %370 = vrot.lane.b32.xlu0 %v368, 32
    %v371 = vpop.permute.xlu0 %370
    %v373 = vadd.f32 %v363, %v371
    %v374 = vtanh.pop %v373
    %376 = vrot.lane.b32.xlu0 %v374, 64
    %v377 = vpop.permute.xlu0 %376
    %v379 = vmul.f32 %v362, %v377
    %381 = vrot.lane.b32.xlu0 %v379, 32
    %v382 = vpop.permute.xlu0 %381
    %v383 = vsel %vm179, %v382, 0
    %385 = vmatprep.subr.mxu0 0.0
    %386 = vmatpush1.msra.mxu0 %v27
    %387 = vmatprep.subr.mxu0 0.0
    %388 = vmatpush1.msra.mxu0 %v28
    %389 = vmatprep.subr.mxu0 0.0
    %390 = vmatpush1.msra.mxu0 %v29
    %391 = vmatprep.subr.mxu0 0.0
    %392 = vmatpush1.msra.mxu0 %v30
    %393 = vmatprep.subr.mxu0 0.0
    %394 = vmatpush1.msra.mxu0 0.0
    %395 = vmatprep.subr.mxu0 0.0
    %396 = vmatpush1.msra.mxu0 0.0
    %397 = vmatprep.subr.mxu0 0.0
    %398 = vmatpush1.msra.mxu0 0.0
    %399 = vmatprep.subr.mxu0 0.0
    %400 = vmatpush1.msra.mxu0 0.0
    %401 = vmatprep.subr.mxu0 0.0
    %402 = vmatpush1.msra.mxu0 0.0
    %403 = vmatprep.subr.mxu0 0.0
    %404 = vmatpush1.msra.mxu0 0.0
    %405 = vmatprep.subr.mxu0 0.0
    %406 = vmatpush1.msra.mxu0 0.0
    %407 = vmatprep.subr.mxu0 0.0
    %408 = vmatpush1.msra.mxu0 0.0
    %409 = vmatprep.subr.mxu0 0.0
    %410 = vmatpush1.msra.mxu0 0.0
    %411 = vmatprep.subr.mxu0 0.0
    %412 = vmatpush1.msra.mxu0 0.0
    %413 = vmatprep.subr.mxu0 0.0
    %414 = vmatpush1.msra.mxu0 0.0
    %415 = vmatprep.subr.mxu0 0.0
    %416 = vmatpush1.msra.mxu0 0.0
    %417 = vmatprep.subr.mxu0 0.0
    %418 = vmatpush1.msra.mxu0 0.0
    %419 = vmatprep.subr.mxu0 0.0
    %420 = vmatpush1.msra.mxu0 0.0
    %421 = vmatprep.subr.mxu0 0.0
    %422 = vmatpush1.msra.mxu0 0.0
    %423 = vmatprep.subr.mxu0 0.0
    %424 = vmatpush1.msra.mxu0 0.0
    %425 = vmatprep.subr.mxu0 0.0
    %426 = vmatpush1.msra.mxu0 0.0
    %427 = vmatprep.subr.mxu0 0.0
    %428 = vmatpush1.msra.mxu0 0.0
    %429 = vmatprep.subr.mxu0 0.0
    %430 = vmatpush1.msra.mxu0 0.0
    %431 = vmatprep.subr.mxu0 0.0
    %432 = vmatpush1.msra.mxu0 0.0
    %433 = vmatprep.subr.mxu0 0.0
    %434 = vmatpush1.msra.mxu0 0.0
    %435 = vmatprep.subr.mxu0 0.0
    %436 = vmatpush1.msra.mxu0 0.0
    %437 = vmatprep.subr.mxu0 0.0
    %438 = vmatpush1.msra.mxu0 0.0
    %439 = vmatprep.subr.mxu0 0.0
    %440 = vmatpush1.msra.mxu0 0.0
    %441 = vmatprep.subr.mxu0 0.0
    %442 = vmatpush1.msra.mxu0 0.0
    %443 = vmatprep.subr.mxu0 0.0
    %444 = vmatpush1.msra.mxu0 0.0
    %445 = vmatprep.subr.mxu0 0.0
    %446 = vmatpush1.msra.mxu0 0.0
    %447 = vmatprep.subr.mxu0 0.0
    %448 = vmatpush1.msra.mxu0 0.0
    %449 = vmatprep.mubr.f32.mxu0 0.0
    %450 = vmatmul.mubr.f32.gmra.mrb[0].mxu0 %v383
    %v451 = vpop.f32.mrb[0].mxu0
    %v452 = vadd.f32 0.0, %v451
    %v453 = vpop.f32.mrb[0].mxu0
    %454 = vdwg.mxu0
    %v455 = vadd.f32 %v146, %v452
    %v456 = vtanh.pop %v455
    %v457 = vxor.u32 %v455, 2147483648
    %v458 = vmul.f32 %v457, 1.442695
    %v459 = vpow.pop %v458
    %v460 = vadd.f32 %v459, 1.0
    %v461 = vrcp.pop %v460
    %v462 = vmul.f32 1.0, %v461
    %v463 = vsel %vm178, %v456, %v462
    %v464 = vmul.f32 %v463, %v373
    %466 = vrot.lane.b32.xlu0 %v463, 64
    %v467 = vpop.permute.xlu0 %466
    %v469 = vmul.f32 %v463, %v467
    %471 = vrot.lane.b32.xlu0 %v469, 32
    %v472 = vpop.permute.xlu0 %471
    %v474 = vadd.f32 %v464, %v472
    %v475 = vtanh.pop %v474
    %477 = vrot.lane.b32.xlu0 %v475, 64
    %v478 = vpop.permute.xlu0 %477
    %v480 = vmul.f32 %v463, %v478
    %482 = vrot.lane.b32.xlu0 %v480, 32
    %v483 = vpop.permute.xlu0 %482
    %v484 = vsel %vm179, %v483, 0
    %486 = vmatprep.subr.mxu0 0.0
    %487 = vmatpush1.msra.mxu0 %v27
    %488 = vmatprep.subr.mxu0 0.0
    %489 = vmatpush1.msra.mxu0 %v28
    %490 = vmatprep.subr.mxu0 0.0
    %491 = vmatpush1.msra.mxu0 %v29
    %492 = vmatprep.subr.mxu0 0.0
    %493 = vmatpush1.msra.mxu0 %v30
    %494 = vmatprep.subr.mxu0 0.0
    %495 = vmatpush1.msra.mxu0 0.0
    %496 = vmatprep.subr.mxu0 0.0
    %497 = vmatpush1.msra.mxu0 0.0
    %498 = vmatprep.subr.mxu0 0.0
    %499 = vmatpush1.msra.mxu0 0.0
    %500 = vmatprep.subr.mxu0 0.0
    %501 = vmatpush1.msra.mxu0 0.0
    %502 = vmatprep.subr.mxu0 0.0
    %503 = vmatpush1.msra.mxu0 0.0
    %504 = vmatprep.subr.mxu0 0.0
    %505 = vmatpush1.msra.mxu0 0.0
    %506 = vmatprep.subr.mxu0 0.0
    %507 = vmatpush1.msra.mxu0 0.0
    %508 = vmatprep.subr.mxu0 0.0
    %509 = vmatpush1.msra.mxu0 0.0
    %510 = vmatprep.subr.mxu0 0.0
    %511 = vmatpush1.msra.mxu0 0.0
    %512 = vmatprep.subr.mxu0 0.0
    %513 = vmatpush1.msra.mxu0 0.0
    %514 = vmatprep.subr.mxu0 0.0
    %515 = vmatpush1.msra.mxu0 0.0
    %516 = vmatprep.subr.mxu0 0.0
    %517 = vmatpush1.msra.mxu0 0.0
    %518 = vmatprep.subr.mxu0 0.0
    %519 = vmatpush1.msra.mxu0 0.0
    %520 = vmatprep.subr.mxu0 0.0
    %521 = vmatpush1.msra.mxu0 0.0
    %522 = vmatprep.subr.mxu0 0.0
    %523 = vmatpush1.msra.mxu0 0.0
    %524 = vmatprep.subr.mxu0 0.0
    %525 = vmatpush1.msra.mxu0 0.0
    %526 = vmatprep.subr.mxu0 0.0
    %527 = vmatpush1.msra.mxu0 0.0
    %528 = vmatprep.subr.mxu0 0.0
    %529 = vmatpush1.msra.mxu0 0.0
    %530 = vmatprep.subr.mxu0 0.0
    %531 = vmatpush1.msra.mxu0 0.0
    %532 = vmatprep.subr.mxu0 0.0
    %533 = vmatpush1.msra.mxu0 0.0
    %534 = vmatprep.subr.mxu0 0.0
    %535 = vmatpush1.msra.mxu0 0.0
    %536 = vmatprep.subr.mxu0 0.0
    %537 = vmatpush1.msra.mxu0 0.0
    %538 = vmatprep.subr.mxu0 0.0
    %539 = vmatpush1.msra.mxu0 0.0
    %540 = vmatprep.subr.mxu0 0.0
    %541 = vmatpush1.msra.mxu0 0.0
    %542 = vmatprep.subr.mxu0 0.0
    %543 = vmatpush1.msra.mxu0 0.0
    %544 = vmatprep.subr.mxu0 0.0
    %545 = vmatpush1.msra.mxu0 0.0
    %546 = vmatprep.subr.mxu0 0.0
    %547 = vmatpush1.msra.mxu0 0.0
    %548 = vmatprep.subr.mxu0 0.0
    %549 = vmatpush1.msra.mxu0 0.0
    %550 = vmatprep.mubr.f32.mxu0 0.0
    %551 = vmatmul.mubr.f32.gmra.mrb[0].mxu0 %v484
    %v552 = vpop.f32.mrb[0].mxu0
    %v553 = vadd.f32 0.0, %v552
    %v554 = vpop.f32.mrb[0].mxu0
    %555 = vdwg.mxu0
    %v556 = vadd.f32 %v151, %v553
    %v557 = vtanh.pop %v556
    %v558 = vxor.u32 %v556, 2147483648
    %v559 = vmul.f32 %v558, 1.442695
    %v560 = vpow.pop %v559
    %v561 = vadd.f32 %v560, 1.0
    %v562 = vrcp.pop %v561
    %v563 = vmul.f32 1.0, %v562
    %v564 = vsel %vm178, %v557, %v563
    %v565 = vmul.f32 %v564, %v474
    %567 = vrot.lane.b32.xlu0 %v564, 64
    %v568 = vpop.permute.xlu0 %567
    %v570 = vmul.f32 %v564, %v568
    %572 = vrot.lane.b32.xlu0 %v570, 32
    %v573 = vpop.permute.xlu0 %572
    %v575 = vadd.f32 %v565, %v573
    %v576 = vtanh.pop %v575
    %578 = vrot.lane.b32.xlu0 %v576, 64
    %v579 = vpop.permute.xlu0 %578
    %v581 = vmul.f32 %v564, %v579
    %583 = vrot.lane.b32.xlu0 %v581, 32
    %v584 = vpop.permute.xlu0 %583
    %v585 = vsel %vm179, %v584, 0
    %587 = vmatprep.subr.mxu0 0.0
    %588 = vmatpush1.msra.mxu0 %v27
    %589 = vmatprep.subr.mxu0 0.0
    %590 = vmatpush1.msra.mxu0 %v28
    %591 = vmatprep.subr.mxu0 0.0
    %592 = vmatpush1.msra.mxu0 %v29
    %593 = vmatprep.subr.mxu0 0.0
    %594 = vmatpush1.msra.mxu0 %v30
    %595 = vmatprep.subr.mxu0 0.0
    %596 = vmatpush1.msra.mxu0 0.0
    %597 = vmatprep.subr.mxu0 0.0
    %598 = vmatpush1.msra.mxu0 0.0
    %599 = vmatprep.subr.mxu0 0.0
    %600 = vmatpush1.msra.mxu0 0.0
    %601 = vmatprep.subr.mxu0 0.0
    %602 = vmatpush1.msra.mxu0 0.0
    %603 = vmatprep.subr.mxu0 0.0
    %604 = vmatpush1.msra.mxu0 0.0
    %605 = vmatprep.subr.mxu0 0.0
    %606 = vmatpush1.msra.mxu0 0.0
    %607 = vmatprep.subr.mxu0 0.0
    %608 = vmatpush1.msra.mxu0 0.0
    %609 = vmatprep.subr.mxu0 0.0
    %610 = vmatpush1.msra.mxu0 0.0
    %611 = vmatprep.subr.mxu0 0.0
    %612 = vmatpush1.msra.mxu0 0.0
    %613 = vmatprep.subr.mxu0 0.0
    %614 = vmatpush1.msra.mxu0 0.0
    %615 = vmatprep.subr.mxu0 0.0
    %616 = vmatpush1.msra.mxu0 0.0
    %617 = vmatprep.subr.mxu0 0.0
    %618 = vmatpush1.msra.mxu0 0.0
    %619 = vmatprep.subr.mxu0 0.0
    %620 = vmatpush1.msra.mxu0 0.0
    %621 = vmatprep.subr.mxu0 0.0
    %622 = vmatpush1.msra.mxu0 0.0
    %623 = vmatprep.subr.mxu0 0.0
    %624 = vmatpush1.msra.mxu0 0.0
    %625 = vmatprep.subr.mxu0 0.0
    %626 = vmatpush1.msra.mxu0 0.0
    %627 = vmatprep.subr.mxu0 0.0
    %628 = vmatpush1.msra.mxu0 0.0
    %629 = vmatprep.subr.mxu0 0.0
    %630 = vmatpush1.msra.mxu0 0.0
    %631 = vmatprep.subr.mxu0 0.0
    %632 = vmatpush1.msra.mxu0 0.0
    %633 = vmatprep.subr.mxu0 0.0
    %634 = vmatpush1.msra.mxu0 0.0
    %635 = vmatprep.subr.mxu0 0.0
    %636 = vmatpush1.msra.mxu0 0.0
    %637 = vmatprep.subr.mxu0 0.0
    %638 = vmatpush1.msra.mxu0 0.0
    %639 = vmatprep.subr.mxu0 0.0
    %640 = vmatpush1.msra.mxu0 0.0
    %641 = vmatprep.subr.mxu0 0.0
    %642 = vmatpush1.msra.mxu0 0.0
    %643 = vmatprep.subr.mxu0 0.0
    %644 = vmatpush1.msra.mxu0 0.0
    %645 = vmatprep.subr.mxu0 0.0
    %646 = vmatpush1.msra.mxu0 0.0
    %647 = vmatprep.subr.mxu0 0.0
    %648 = vmatpush1.msra.mxu0 0.0
    %649 = vmatprep.subr.mxu0 0.0
    %650 = vmatpush1.msra.mxu0 0.0
    %651 = vmatprep.mubr.f32.mxu0 0.0
    %652 = vmatmul.mubr.f32.gmra.mrb[0].mxu0 %v585
    %v653 = vpop.f32.mrb[0].mxu0
    %v654 = vadd.f32 0.0, %v653
    %v655 = vpop.f32.mrb[0].mxu0
    %656 = vdwg.mxu0
    %v657 = vadd.f32 %v156, %v654
    %v658 = vtanh.pop %v657
    %v659 = vxor.u32 %v657, 2147483648
    %v660 = vmul.f32 %v659, 1.442695
    %v661 = vpow.pop %v660
    %v662 = vadd.f32 %v661, 1.0
    %v663 = vrcp.pop %v662
    %v664 = vmul.f32 1.0, %v663
    %v665 = vsel %vm178, %v658, %v664
    %v666 = vmul.f32 %v665, %v575
    %668 = vrot.lane.b32.xlu0 %v665, 64
    %v669 = vpop.permute.xlu0 %668
    %v671 = vmul.f32 %v665, %v669
    %673 = vrot.lane.b32.xlu0 %v671, 32
    %v674 = vpop.permute.xlu0 %673
    %v676 = vadd.f32 %v666, %v674
    %v677 = vtanh.pop %v676
    %679 = vrot.lane.b32.xlu0 %v677, 64
    %v680 = vpop.permute.xlu0 %679
    %v682 = vmul.f32 %v665, %v680
    %684 = vrot.lane.b32.xlu0 %v682, 32
    %v685 = vpop.permute.xlu0 %684
    %v686 = vsel %vm179, %v685, 0
    %688 = vmatprep.subr.mxu0 0.0
    %689 = vmatpush1.msra.mxu0 %v27
    %690 = vmatprep.subr.mxu0 0.0
    %691 = vmatpush1.msra.mxu0 %v28
    %692 = vmatprep.subr.mxu0 0.0
    %693 = vmatpush1.msra.mxu0 %v29
    %694 = vmatprep.subr.mxu0 0.0
    %695 = vmatpush1.msra.mxu0 %v30
    %696 = vmatprep.subr.mxu0 0.0
    %697 = vmatpush1.msra.mxu0 0.0
    %698 = vmatprep.subr.mxu0 0.0
    %699 = vmatpush1.msra.mxu0 0.0
    %700 = vmatprep.subr.mxu0 0.0
    %701 = vmatpush1.msra.mxu0 0.0
    %702 = vmatprep.subr.mxu0 0.0
    %703 = vmatpush1.msra.mxu0 0.0
    %704 = vmatprep.subr.mxu0 0.0
    %705 = vmatpush1.msra.mxu0 0.0
    %706 = vmatprep.subr.mxu0 0.0
    %707 = vmatpush1.msra.mxu0 0.0
    %708 = vmatprep.subr.mxu0 0.0
    %709 = vmatpush1.msra.mxu0 0.0
    %710 = vmatprep.subr.mxu0 0.0
    %711 = vmatpush1.msra.mxu0 0.0
    %712 = vmatprep.subr.mxu0 0.0
    %713 = vmatpush1.msra.mxu0 0.0
    %714 = vmatprep.subr.mxu0 0.0
    %715 = vmatpush1.msra.mxu0 0.0
    %716 = vmatprep.subr.mxu0 0.0
    %717 = vmatpush1.msra.mxu0 0.0
    %718 = vmatprep.subr.mxu0 0.0
    %719 = vmatpush1.msra.mxu0 0.0
    %720 = vmatprep.subr.mxu0 0.0
    %721 = vmatpush1.msra.mxu0 0.0
    %722 = vmatprep.subr.mxu0 0.0
    %723 = vmatpush1.msra.mxu0 0.0
    %724 = vmatprep.subr.mxu0 0.0
    %725 = vmatpush1.msra.mxu0 0.0
    %726 = vmatprep.subr.mxu0 0.0
    %727 = vmatpush1.msra.mxu0 0.0
    %728 = vmatprep.subr.mxu0 0.0
    %729 = vmatpush1.msra.mxu0 0.0
    %730 = vmatprep.subr.mxu0 0.0
    %731 = vmatpush1.msra.mxu0 0.0
    %732 = vmatprep.subr.mxu0 0.0
    %733 = vmatpush1.msra.mxu0 0.0
    %734 = vmatprep.subr.mxu0 0.0
    %735 = vmatpush1.msra.mxu0 0.0
    %736 = vmatprep.subr.mxu0 0.0
    %737 = vmatpush1.msra.mxu0 0.0
    %738 = vmatprep.subr.mxu0 0.0
    %739 = vmatpush1.msra.mxu0 0.0
    %740 = vmatprep.subr.mxu0 0.0
    %741 = vmatpush1.msra.mxu0 0.0
    %742 = vmatprep.subr.mxu0 0.0
    %743 = vmatpush1.msra.mxu0 0.0
    %744 = vmatprep.subr.mxu0 0.0
    %745 = vmatpush1.msra.mxu0 0.0
    %746 = vmatprep.subr.mxu0 0.0
    %747 = vmatpush1.msra.mxu0 0.0
    %748 = vmatprep.subr.mxu0 0.0
    %749 = vmatpush1.msra.mxu0 0.0
    %750 = vmatprep.subr.mxu0 0.0
    %751 = vmatpush1.msra.mxu0 0.0
    %752 = vmatprep.mubr.f32.mxu0 0.0
    %753 = vmatmul.mubr.f32.gmra.mrb[0].mxu0 %v686
    %v754 = vpop.f32.mrb[0].mxu0
    %v755 = vadd.f32 0.0, %v754
    %v756 = vpop.f32.mrb[0].mxu0
    %757 = vdwg.mxu0
    %v758 = vadd.f32 %v161, %v755
    %v759 = vtanh.pop %v758
    %v760 = vxor.u32 %v758, 2147483648
    %v761 = vmul.f32 %v760, 1.442695
    %v762 = vpow.pop %v761
    %v763 = vadd.f32 %v762, 1.0
    %v764 = vrcp.pop %v763
    %v765 = vmul.f32 1.0, %v764
    %v766 = vsel %vm178, %v759, %v765
    %v767 = vmul.f32 %v766, %v676
    %769 = vrot.lane.b32.xlu0 %v766, 64
    %v770 = vpop.permute.xlu0 %769
    %v772 = vmul.f32 %v766, %v770
    %774 = vrot.lane.b32.xlu0 %v772, 32
    %v775 = vpop.permute.xlu0 %774
    %v777 = vadd.f32 %v767, %v775
    %v778 = vtanh.pop %v777
    %780 = vrot.lane.b32.xlu0 %v778, 64
    %v781 = vpop.permute.xlu0 %780
    %v783 = vmul.f32 %v766, %v781
    %785 = vrot.lane.b32.xlu0 %v783, 32
    %v786 = vpop.permute.xlu0 %785
    %v787 = vsel %vm179, %v786, 0
    %789 = vmatprep.subr.mxu0 0.0
    %790 = vmatpush1.msra.mxu0 %v27
    %791 = vmatprep.subr.mxu0 0.0
    %792 = vmatpush1.msra.mxu0 %v28
    %793 = vmatprep.subr.mxu0 0.0
    %794 = vmatpush1.msra.mxu0 %v29
    %795 = vmatprep.subr.mxu0 0.0
    %796 = vmatpush1.msra.mxu0 %v30
    %797 = vmatprep.subr.mxu0 0.0
    %798 = vmatpush1.msra.mxu0 0.0
    %799 = vmatprep.subr.mxu0 0.0
    %800 = vmatpush1.msra.mxu0 0.0
    %801 = vmatprep.subr.mxu0 0.0
    %802 = vmatpush1.msra.mxu0 0.0
    %803 = vmatprep.subr.mxu0 0.0
    %804 = vmatpush1.msra.mxu0 0.0
    %805 = vmatprep.subr.mxu0 0.0
    %806 = vmatpush1.msra.mxu0 0.0
    %807 = vmatprep.subr.mxu0 0.0
    %808 = vmatpush1.msra.mxu0 0.0
    %809 = vmatprep.subr.mxu0 0.0
    %810 = vmatpush1.msra.mxu0 0.0
    %811 = vmatprep.subr.mxu0 0.0
    %812 = vmatpush1.msra.mxu0 0.0
    %813 = vmatprep.subr.mxu0 0.0
    %814 = vmatpush1.msra.mxu0 0.0
    %815 = vmatprep.subr.mxu0 0.0
    %816 = vmatpush1.msra.mxu0 0.0
    %817 = vmatprep.subr.mxu0 0.0
    %818 = vmatpush1.msra.mxu0 0.0
    %819 = vmatprep.subr.mxu0 0.0
    %820 = vmatpush1.msra.mxu0 0.0
    %821 = vmatprep.subr.mxu0 0.0
    %822 = vmatpush1.msra.mxu0 0.0
    %823 = vmatprep.subr.mxu0 0.0
    %824 = vmatpush1.msra.mxu0 0.0
    %825 = vmatprep.subr.mxu0 0.0
    %826 = vmatpush1.msra.mxu0 0.0
    %827 = vmatprep.subr.mxu0 0.0
    %828 = vmatpush1.msra.mxu0 0.0
    %829 = vmatprep.subr.mxu0 0.0
    %830 = vmatpush1.msra.mxu0 0.0
    %831 = vmatprep.subr.mxu0 0.0
    %832 = vmatpush1.msra.mxu0 0.0
    %833 = vmatprep.subr.mxu0 0.0
    %834 = vmatpush1.msra.mxu0 0.0
    %835 = vmatprep.subr.mxu0 0.0
    %836 = vmatpush1.msra.mxu0 0.0
    %837 = vmatprep.subr.mxu0 0.0
    %838 = vmatpush1.msra.mxu0 0.0
    %839 = vmatprep.subr.mxu0 0.0
    %840 = vmatpush1.msra.mxu0 0.0
    %841 = vmatprep.subr.mxu0 0.0
    %842 = vmatpush1.msra.mxu0 0.0
    %843 = vmatprep.subr.mxu0 0.0
    %844 = vmatpush1.msra.mxu0 0.0
    %845 = vmatprep.subr.mxu0 0.0
    %846 = vmatpush1.msra.mxu0 0.0
    %847 = vmatprep.subr.mxu0 0.0
    %848 = vmatpush1.msra.mxu0 0.0
    %849 = vmatprep.subr.mxu0 0.0
    %850 = vmatpush1.msra.mxu0 0.0
    %851 = vmatprep.subr.mxu0 0.0
    %852 = vmatpush1.msra.mxu0 0.0
    %853 = vmatprep.mubr.f32.mxu0 0.0
    %854 = vmatmul.mubr.f32.gmra.mrb[0].mxu0 %v787
    %v855 = vpop.f32.mrb[0].mxu0
    %v856 = vadd.f32 0.0, %v855
    %v857 = vpop.f32.mrb[0].mxu0
    %858 = vdwg.mxu0
    %v859 = vadd.f32 %v166, %v856
    %v860 = vtanh.pop %v859
    %v861 = vxor.u32 %v859, 2147483648
    %v862 = vmul.f32 %v861, 1.442695
    %v863 = vpow.pop %v862
    %v864 = vadd.f32 %v863, 1.0
    %v865 = vrcp.pop %v864
    %v866 = vmul.f32 1.0, %v865
    %v867 = vsel %vm178, %v860, %v866
    %v868 = vmul.f32 %v867, %v777
    %870 = vrot.lane.b32.xlu0 %v867, 64
    %v871 = vpop.permute.xlu0 %870
    %v873 = vmul.f32 %v867, %v871
    %875 = vrot.lane.b32.xlu0 %v873, 32
    %v876 = vpop.permute.xlu0 %875
    %v878 = vadd.f32 %v868, %v876
    %v879 = vtanh.pop %v878
    %881 = vrot.lane.b32.xlu0 %v879, 64
    %v882 = vpop.permute.xlu0 %881
    %v884 = vmul.f32 %v867, %v882
    %886 = vrot.lane.b32.xlu0 %v884, 32
    %v887 = vpop.permute.xlu0 %886
    %v888 = vsel %vm179, %v887, 0
    %890 = vmatprep.subr.mxu0 0.0
    %891 = vmatpush1.msra.mxu0 %v27
    %892 = vmatprep.subr.mxu0 0.0
    %893 = vmatpush1.msra.mxu0 %v28
    %894 = vmatprep.subr.mxu0 0.0
    %895 = vmatpush1.msra.mxu0 %v29
    %896 = vmatprep.subr.mxu0 0.0
    %897 = vmatpush1.msra.mxu0 %v30
    %898 = vmatprep.subr.mxu0 0.0
    %899 = vmatpush1.msra.mxu0 0.0
    %900 = vmatprep.subr.mxu0 0.0
    %901 = vmatpush1.msra.mxu0 0.0
    %902 = vmatprep.subr.mxu0 0.0
    %903 = vmatpush1.msra.mxu0 0.0
    %904 = vmatprep.subr.mxu0 0.0
    %905 = vmatpush1.msra.mxu0 0.0
    %906 = vmatprep.subr.mxu0 0.0
    %907 = vmatpush1.msra.mxu0 0.0
    %908 = vmatprep.subr.mxu0 0.0
    %909 = vmatpush1.msra.mxu0 0.0
    %910 = vmatprep.subr.mxu0 0.0
    %911 = vmatpush1.msra.mxu0 0.0
    %912 = vmatprep.subr.mxu0 0.0
    %913 = vmatpush1.msra.mxu0 0.0
    %914 = vmatprep.subr.mxu0 0.0
    %915 = vmatpush1.msra.mxu0 0.0
    %916 = vmatprep.subr.mxu0 0.0
    %917 = vmatpush1.msra.mxu0 0.0
    %918 = vmatprep.subr.mxu0 0.0
    %919 = vmatpush1.msra.mxu0 0.0
    %920 = vmatprep.subr.mxu0 0.0
    %921 = vmatpush1.msra.mxu0 0.0
    %922 = vmatprep.subr.mxu0 0.0
    %923 = vmatpush1.msra.mxu0 0.0
    %924 = vmatprep.subr.mxu0 0.0
    %925 = vmatpush1.msra.mxu0 0.0
    %926 = vmatprep.subr.mxu0 0.0
    %927 = vmatpush1.msra.mxu0 0.0
    %928 = vmatprep.subr.mxu0 0.0
    %929 = vmatpush1.msra.mxu0 0.0
    %930 = vmatprep.subr.mxu0 0.0
    %931 = vmatpush1.msra.mxu0 0.0
    %932 = vmatprep.subr.mxu0 0.0
    %933 = vmatpush1.msra.mxu0 0.0
    %934 = vmatprep.subr.mxu0 0.0
    %935 = vmatpush1.msra.mxu0 0.0
    %936 = vmatprep.subr.mxu0 0.0
    %937 = vmatpush1.msra.mxu0 0.0
    %938 = vmatprep.subr.mxu0 0.0
    %939 = vmatpush1.msra.mxu0 0.0
    %940 = vmatprep.subr.mxu0 0.0
    %941 = vmatpush1.msra.mxu0 0.0
    %942 = vmatprep.subr.mxu0 0.0
    %943 = vmatpush1.msra.mxu0 0.0
    %944 = vmatprep.subr.mxu0 0.0
    %945 = vmatpush1.msra.mxu0 0.0
    %946 = vmatprep.subr.mxu0 0.0
    %947 = vmatpush1.msra.mxu0 0.0
    %948 = vmatprep.subr.mxu0 0.0
    %949 = vmatpush1.msra.mxu0 0.0
    %950 = vmatprep.subr.mxu0 0.0
    %951 = vmatpush1.msra.mxu0 0.0
    %952 = vmatprep.subr.mxu0 0.0
    %953 = vmatpush1.msra.mxu0 0.0
    %954 = vmatprep.mubr.f32.mxu0 0.0
    %955 = vmatmul.mubr.f32.gmra.mrb[0].mxu0 %v888
    %v956 = vpop.f32.mrb[0].mxu0
    %v957 = vadd.f32 0.0, %v956
    %v958 = vpop.f32.mrb[0].mxu0
    %959 = vdwg.mxu0
    %v960 = vadd.f32 %v171, %v957
    %v961 = vtanh.pop %v960
    %v962 = vxor.u32 %v960, 2147483648
    %v963 = vmul.f32 %v962, 1.442695
    %v964 = vpow.pop %v963
    %v965 = vadd.f32 %v964, 1.0
    %v966 = vrcp.pop %v965
    %v967 = vmul.f32 1.0, %v966
    %v968 = vsel %vm178, %v961, %v967
    %v969 = vmul.f32 %v968, %v878
    %971 = vrot.lane.b32.xlu0 %v968, 64
    %v972 = vpop.permute.xlu0 %971
    %v974 = vmul.f32 %v968, %v972
    %976 = vrot.lane.b32.xlu0 %v974, 32
    %v977 = vpop.permute.xlu0 %976
    %v979 = vadd.f32 %v969, %v977
    %v980 = vtanh.pop %v979
    %982 = vrot.lane.b32.xlu0 %v980, 64
    %v983 = vpop.permute.xlu0 %982
    %v985 = vmul.f32 %v968, %v983
    %v986 = vlaneseq
    %v987 = vshrl.u32 %v986, 7
    %v988 = vsub.s32 0, %v987
    %v989 = vrot.slane %v35, %v988
    %991 = vrot.lane.b32.xlu0 %v985, 32
    %v992 = vpop.permute.xlu0 %991
    %v993 = vsel %vm179, %v992, 0
    %995 = vmatprep.subr.mxu0 0.0
    %996 = vmatpush1.msra.mxu0 %v31
    %997 = vmatprep.subr.mxu0 0.0
    %998 = vmatpush1.msra.mxu0 %v32
    %999 = vmatprep.subr.mxu0 0.0
    %1000 = vmatpush1.msra.mxu0 %v33
    %1001 = vmatprep.subr.mxu0 0.0
    %1002 = vmatpush1.msra.mxu0 %v34
    %1003 = vmatprep.subr.mxu0 0.0
    %1004 = vmatpush1.msra.mxu0 0.0
    %1005 = vmatprep.subr.mxu0 0.0
    %1006 = vmatpush1.msra.mxu0 0.0
    %1007 = vmatprep.subr.mxu0 0.0
    %1008 = vmatpush1.msra.mxu0 0.0
    %1009 = vmatprep.subr.mxu0 0.0
    %1010 = vmatpush1.msra.mxu0 0.0
    %1011 = vmatprep.subr.mxu0 0.0
    %1012 = vmatpush1.msra.mxu0 0.0
    %1013 = vmatprep.subr.mxu0 0.0
    %1014 = vmatpush1.msra.mxu0 0.0
    %1015 = vmatprep.subr.mxu0 0.0
    %1016 = vmatpush1.msra.mxu0 0.0
    %1017 = vmatprep.subr.mxu0 0.0
    %1018 = vmatpush1.msra.mxu0 0.0
    %1019 = vmatprep.subr.mxu0 0.0
    %1020 = vmatpush1.msra.mxu0 0.0
    %1021 = vmatprep.subr.mxu0 0.0
    %1022 = vmatpush1.msra.mxu0 0.0
    %1023 = vmatprep.subr.mxu0 0.0
    %1024 = vmatpush1.msra.mxu0 0.0
    %1025 = vmatprep.subr.mxu0 0.0
    %1026 = vmatpush1.msra.mxu0 0.0
    %1027 = vmatprep.subr.mxu0 0.0
    %1028 = vmatpush1.msra.mxu0 0.0
    %1029 = vmatprep.subr.mxu0 0.0
    %1030 = vmatpush1.msra.mxu0 0.0
    %1031 = vmatprep.subr.mxu0 0.0
    %1032 = vmatpush1.msra.mxu0 0.0
    %1033 = vmatprep.subr.mxu0 0.0
    %1034 = vmatpush1.msra.mxu0 0.0
    %1035 = vmatprep.subr.mxu0 0.0
    %1036 = vmatpush1.msra.mxu0 0.0
    %1037 = vmatprep.subr.mxu0 0.0
    %1038 = vmatpush1.msra.mxu0 0.0
    %1039 = vmatprep.subr.mxu0 0.0
    %1040 = vmatpush1.msra.mxu0 0.0
    %1041 = vmatprep.subr.mxu0 0.0
    %1042 = vmatpush1.msra.mxu0 0.0
    %1043 = vmatprep.subr.mxu0 0.0
    %1044 = vmatpush1.msra.mxu0 0.0
    %1045 = vmatprep.subr.mxu0 0.0
    %1046 = vmatpush1.msra.mxu0 0.0
    %1047 = vmatprep.subr.mxu0 0.0
    %1048 = vmatpush1.msra.mxu0 0.0
    %1049 = vmatprep.subr.mxu0 0.0
    %1050 = vmatpush1.msra.mxu0 0.0
    %1051 = vmatprep.subr.mxu0 0.0
    %1052 = vmatpush1.msra.mxu0 0.0
    %1053 = vmatprep.subr.mxu0 0.0
    %1054 = vmatpush1.msra.mxu0 0.0
    %1055 = vmatprep.subr.mxu0 0.0
    %1056 = vmatpush1.msra.mxu0 0.0
    %1057 = vmatprep.subr.mxu0 0.0
    %1058 = vmatpush1.msra.mxu0 0.0
    %1059 = vmatprep.mubr.f32.mxu0 0.0
    %1060 = vmatmul.mubr.f32.gmra.mrb[0].mxu0 %v993
    %v1061 = vpop.f32.mrb[0].mxu0
    %v1062 = vadd.f32 %v989, %v1061
    %v1063 = vpop.f32.mrb[0].mxu0
    %1064 = vdwg.mxu0
    %1065 = vst [vmem:[#allocation5] sm:$0xff] %v1062
    // Predicated region
    $region14: #{tpu_custom_call.1} parent=1 // pred_check
      _
    $region15: #{tpu_custom_call.1} parent=1 // pred_check_branch
      %1067 = sbr.rel (0) target = $region17
    $region16: #{tpu_custom_call.1} parent=1 // pred_region
      %s1069 = ssub.s32 128, 128
      %1070 = vsyncadd [#allocation4], %s1069
      %s1072 = sshll.u32 [#allocation5], 4
      %s1073 = int_to_ptr.vmem [resolvable:$true] %s1072
      %1075 = dma.vmem_to_hbm [thread:$0]  %s1073, 128, %s2, [#allocation4]
    $region17: #{tpu_custom_call.1} parent=1 // pred_fallthru
      _
    // Predicated region
    $region18: #{tpu_custom_call.1} parent=1 // pred_check
      _
    $region19: #{tpu_custom_call.1} parent=1 // pred_check_branch
      %1077 = sbr.rel (0) target = $region21
    $region20: #{tpu_custom_call.1} parent=1 // pred_region
      %1078 = dma.done [#allocation4], 128
    $region21: #{tpu_custom_call.1} parent=1 // pred_fallthru
      _
    %1079 = vsyncpa [#allocation3], 1
    %1080 = vsyncpa [#allocation4], 1

</llo_original>
